<compile_context>
chip_gen: v7x
topology: tpu7x:2x2x1
jax: 0.10.0
libtpu: 0.0.40
codegen_flags: <defaults>
</compile_context>

<pallas_src>
import functools

import jax
import jax.numpy as jnp
from jax.experimental import pallas as pl
from jax.experimental.pallas import tpu as pltpu

LANE = 128     # vreg lane width (last dim)
SUBLANE = 8    # vreg sublane count (second-to-last dim)


def _round_up(x, m):
    return ((x + m - 1) // m) * m


def _mlp_fused_kernel(x_ref, w_ref, b_ref, o_ref):
    """One batch tile through the whole MLP, entirely in VMEM/vregs.

    x_ref: (TILE_B, din)   f32, natural (unpadded) feature width
    w_ref: (L, D_p, D_p)   bf16, zero-padded stacked weights laid out (in, out)
    b_ref: (L, 1, D_p)     f32, zero-padded stacked biases
    o_ref: (TILE_B, D_p)   f32 (lane-dense, 128-wide)
    """
    n_layers = w_ref.shape[0]
    din = x_ref.shape[1]

    # Layer 0: only the first `din` weight rows matter (the rest are zero pad),
    # so slice the weight instead of lane-padding the activation.
    x = x_ref[...].astype(jnp.bfloat16)
    w0 = w_ref[0][:din, :]
    h = jnp.dot(x, w0, preferred_element_type=jnp.float32) + b_ref[0]

    for li in range(1, n_layers):
        h = jnp.tanh(h)  # f32 on EUP; padded lanes stay tanh(0)=0
        h = jnp.dot(h.astype(jnp.bfloat16), w_ref[li],
                    preferred_element_type=jnp.float32) + b_ref[li]

    o_ref[...] = h.astype(o_ref.dtype)


def init_params(key, input_size, output_size, hidden_size, num_hidden):
    """Mirror the PyTorch module: xavier_normal_ weights, PyTorch-default
    uniform biases. Weights are stored transposed to (in, out)."""
    sizes = ([input_size]
             + [hidden_size] * max(num_hidden - 1, 1)
             + [output_size])
    params = []
    for li in range(len(sizes) - 1):
        fan_in, fan_out = sizes[li], sizes[li + 1]
        key, kw, kb = jax.random.split(key, 3)
        std = (2.0 / (fan_in + fan_out)) ** 0.5  # xavier normal
        w = std * jax.random.normal(kw, (fan_in, fan_out), dtype=jnp.float32)
        bound = 1.0 / (fan_in ** 0.5)
        b = jax.random.uniform(kb, (fan_out,), minval=-bound, maxval=bound,
                               dtype=jnp.float32)
        params.append((w, b))
    return params


def stack_params(params):
    """Zero-pad every layer to a uniform (D_p, D_p) tile and stack:
    weights -> (L, D_p, D_p) bf16 (MXU-native), biases -> (L, 1, D_p) f32."""
    dims = [params[0][0].shape[0]] + [w.shape[1] for w, _ in params]
    d_p = _round_up(max(dims), LANE)
    w_stack = jnp.zeros((len(params), d_p, d_p), jnp.float32)
    b_stack = jnp.zeros((len(params), 1, d_p), jnp.float32)
    for li, (w, b) in enumerate(params):
        din, dout = w.shape
        w_stack = w_stack.at[li, :din, :dout].set(w)
        b_stack = b_stack.at[li, 0, :dout].set(b)
    return w_stack.astype(jnp.bfloat16), b_stack


@functools.partial(jax.jit, static_argnames=("out_features",))
def neural_network_forward(x, w_stack, b_stack, out_features):
    """Matches NeuralNetwork.forward: tanh after every layer except the last."""
    B, din = x.shape
    L, d_p, _ = w_stack.shape

    # Batch tile: 128 MXU rows when the batch is big enough, otherwise just a
    # sublane-aligned single tile (no wasted padding for tiny batches).
    tile_b = min(128, _round_up(B, SUBLANE))
    b_p = _round_up(B, tile_b)
    if b_p != B:  # only emits a pad HLO when the batch is not tile-aligned
        x = jnp.zeros((b_p, din), x.dtype).at[:B, :].set(x)

    out_p = pl.pallas_call(
        _mlp_fused_kernel,
        out_shape=jax.ShapeDtypeStruct((b_p, d_p), jnp.float32),
        grid=(b_p // tile_b,),
        in_specs=[
            pl.BlockSpec((tile_b, din), lambda i: (i, 0)),   # batch tile of x
            pl.BlockSpec((L, d_p, d_p), lambda i: (0, 0, 0)),  # resident weights
            pl.BlockSpec((L, 1, d_p), lambda i: (0, 0, 0)),    # resident biases
        ],
        out_specs=pl.BlockSpec((tile_b, d_p), lambda i: (i, 0)),
        compiler_params=pltpu.CompilerParams(
            # Batch tiles are independent -> shard across v7x's 2 TensorCores.
            dimension_semantics=("parallel",)),
    )(x, w_stack, b_stack)

    return out_p[:B, :out_features]


if __name__ == "__main__":
    batch = 256          # >= one full MXU row tile; 2 batch tiles for v7x's 2 TCs
    input_size = 32
    hidden_size = 32
    output_size = 16
    num_hidden = 3       # layers: Linear(32,32), Linear(32,32), Linear(32,16)

    key = jax.random.PRNGKey(0)
    key, kx = jax.random.split(key)
    x = jax.random.normal(kx, (batch, input_size), dtype=jnp.float32)

    params = init_params(key, input_size, output_size, hidden_size, num_hidden)
    w_stack, b_stack = stack_params(params)

    out = neural_network_forward(x, w_stack, b_stack, output_size)
    out = jax.block_until_ready(out)

    # Reference with the same bf16-matmul / f32-accumulate math as the kernel.
    ref = x
    for li, (w, b) in enumerate(params):
        ref = jnp.dot(ref.astype(jnp.bfloat16), w.astype(jnp.bfloat16),
                      preferred_element_type=jnp.float32) + b
        if li < len(params) - 1:
            ref = jnp.tanh(ref)

    assert out.shape == (batch, output_size)
    assert jnp.allclose(out, ref, atol=1e-3, rtol=1e-3), \
        float(jnp.max(jnp.abs(out - ref)))

    # TODO(synk): nn.Dropout is defined in the module but never applied in
    # forward(), so it is intentionally omitted.
    print("KERNEL_OK")
</pallas_src>

<mosaic_0001>
module attributes {stable_mosaic.version = 11 : i64} {
  func.func @_mlp_fused_kernel(%arg0: i32, %arg1: memref<128x32xf32, #tpu.memory_space<vmem>>, %arg2: memref<3x128x128xbf16, #tpu.memory_space<vmem>>, %arg3: memref<3x1x128xf32, #tpu.memory_space<vmem>>, %arg4: memref<128x128xf32, #tpu.memory_space<vmem>>) attributes {dimension_semantics = [#tpu.dimension_semantics<parallel>], iteration_bounds = array<i64: 2>, scalar_prefetch = 0 : i64, scratch_operands = 0 : i64, tpu.core_type = #tpu.core_type<tc>, window_params = [{transform_indices = @transform_0, window_bounds = array<i64: 128, 32>}, {pipeline_mode = #tpu.pipeline_mode<synchronous>, transform_indices = @transform_1, window_bounds = array<i64: 3, 128, 128>}, {pipeline_mode = #tpu.pipeline_mode<synchronous>, transform_indices = @transform_2, window_bounds = array<i64: 3, 1, 128>}, {transform_indices = @transform_3, window_bounds = array<i64: 128, 128>}]} {
    %c0 = arith.constant 0 : index
    %c0_0 = arith.constant 0 : index
    %0 = vector.load %arg1[%c0, %c0_0] : memref<128x32xf32, #tpu.memory_space<vmem>>, vector<128x32xf32>
    %1 = arith.truncf %0 : vector<128x32xf32> to vector<128x32xbf16>
    %c0_1 = arith.constant 0 : index
    %c0_2 = arith.constant 0 : index
    %c0_3 = arith.constant 0 : index
    %2 = vector.load %arg2[%c0_1, %c0_2, %c0_3] : memref<3x128x128xbf16, #tpu.memory_space<vmem>>, vector<1x128x128xbf16>
    %3 = vector.shape_cast %2 : vector<1x128x128xbf16> to vector<128x128xbf16>
    %4 = vector.extract_strided_slice %3 {offsets = [0, 0], sizes = [32, 128], strides = [1, 1]} : vector<128x128xbf16> to vector<32x128xbf16>
    %cst = arith.constant dense<0.000000e+00> : vector<128x128xf32>
    %5 = tpu.matmul %1, %4, %cst {dimension_numbers = #tpu.dot_dimension_numbers<[1], [0], [0], [1], [0, 0, 1, 1], [], []>} : vector<128x32xbf16>, vector<32x128xbf16>, vector<128x128xf32> -> vector<128x128xf32>
    %c0_4 = arith.constant 0 : index
    %c0_5 = arith.constant 0 : index
    %c0_6 = arith.constant 0 : index
    %6 = vector.load %arg3[%c0_4, %c0_5, %c0_6] : memref<3x1x128xf32, #tpu.memory_space<vmem>>, vector<1x1x128xf32>
    %7 = vector.shape_cast %6 : vector<1x1x128xf32> to vector<1x128xf32>
    %8 = vector.broadcast %7 : vector<1x128xf32> to vector<128x128xf32>
    %9 = arith.addf %5, %8 : vector<128x128xf32>
    %10 = math.tanh %9 : vector<128x128xf32>
    %11 = arith.truncf %10 : vector<128x128xf32> to vector<128x128xbf16>
    %c1 = arith.constant 1 : index
    %c0_7 = arith.constant 0 : index
    %c0_8 = arith.constant 0 : index
    %12 = vector.load %arg2[%c1, %c0_7, %c0_8] : memref<3x128x128xbf16, #tpu.memory_space<vmem>>, vector<1x128x128xbf16>
    %13 = vector.shape_cast %12 : vector<1x128x128xbf16> to vector<128x128xbf16>
    %cst_9 = arith.constant dense<0.000000e+00> : vector<128x128xf32>
    %14 = tpu.matmul %11, %13, %cst_9 {dimension_numbers = #tpu.dot_dimension_numbers<[1], [0], [0], [1], [0, 0, 1, 1], [], []>} : vector<128x128xbf16>, vector<128x128xbf16>, vector<128x128xf32> -> vector<128x128xf32>
    %c1_10 = arith.constant 1 : index
    %c0_11 = arith.constant 0 : index
    %c0_12 = arith.constant 0 : index
    %15 = vector.load %arg3[%c1_10, %c0_11, %c0_12] : memref<3x1x128xf32, #tpu.memory_space<vmem>>, vector<1x1x128xf32>
    %16 = vector.shape_cast %15 : vector<1x1x128xf32> to vector<1x128xf32>
    %17 = vector.broadcast %16 : vector<1x128xf32> to vector<128x128xf32>
    %18 = arith.addf %14, %17 : vector<128x128xf32>
    %19 = math.tanh %18 : vector<128x128xf32>
    %20 = arith.truncf %19 : vector<128x128xf32> to vector<128x128xbf16>
    %c2 = arith.constant 2 : index
    %c0_13 = arith.constant 0 : index
    %c0_14 = arith.constant 0 : index
    %21 = vector.load %arg2[%c2, %c0_13, %c0_14] : memref<3x128x128xbf16, #tpu.memory_space<vmem>>, vector<1x128x128xbf16>
    %22 = vector.shape_cast %21 : vector<1x128x128xbf16> to vector<128x128xbf16>
    %cst_15 = arith.constant dense<0.000000e+00> : vector<128x128xf32>
    %23 = tpu.matmul %20, %22, %cst_15 {dimension_numbers = #tpu.dot_dimension_numbers<[1], [0], [0], [1], [0, 0, 1, 1], [], []>} : vector<128x128xbf16>, vector<128x128xbf16>, vector<128x128xf32> -> vector<128x128xf32>
    %c2_16 = arith.constant 2 : index
    %c0_17 = arith.constant 0 : index
    %c0_18 = arith.constant 0 : index
    %24 = vector.load %arg3[%c2_16, %c0_17, %c0_18] : memref<3x1x128xf32, #tpu.memory_space<vmem>>, vector<1x1x128xf32>
    %25 = vector.shape_cast %24 : vector<1x1x128xf32> to vector<1x128xf32>
    %26 = vector.broadcast %25 : vector<1x128xf32> to vector<128x128xf32>
    %27 = arith.addf %23, %26 : vector<128x128xf32>
    %c0_19 = arith.constant 0 : index
    %c0_20 = arith.constant 0 : index
    %28 = vector.load %arg4[%c0_19, %c0_20] : memref<128x128xf32, #tpu.memory_space<vmem>>, vector<128x128xf32>
    tpu.vector_store %arg4[%c0_19, %c0_20], %27 {strides = array<i32>} : memref<128x128xf32, #tpu.memory_space<vmem>>, vector<128x128xf32>,
    return
  }
  func.func @transform_0(%arg0: i32) -> (i32, i32) {
    %c0_i32 = arith.constant 0 : i32
    %c0_i32_0 = arith.constant 0 : i32
    return %arg0, %c0_i32 : i32, i32
  }
  func.func @transform_1(%arg0: i32) -> (i32, i32, i32) {
    %c0_i32 = arith.constant 0 : i32
    %c0_i32_0 = arith.constant 0 : i32
    %c0_i32_1 = arith.constant 0 : i32
    %c0_i32_2 = arith.constant 0 : i32
    return %c0_i32, %c0_i32_0, %c0_i32_1 : i32, i32, i32
  }
  func.func @transform_2(%arg0: i32) -> (i32, i32, i32) {
    %c0_i32 = arith.constant 0 : i32
    %c0_i32_0 = arith.constant 0 : i32
    %c0_i32_1 = arith.constant 0 : i32
    %c0_i32_2 = arith.constant 0 : i32
    return %c0_i32, %c0_i32_0, %c0_i32_1 : i32, i32, i32
  }
  func.func @transform_3(%arg0: i32) -> (i32, i32) {
    %c0_i32 = arith.constant 0 : i32
    %c0_i32_0 = arith.constant 0 : i32
    return %arg0, %c0_i32 : i32, i32
  }
}

</mosaic_0001>

<llo_original>
// kernel: neural_network_forward.1
$region0: #{neural_network_forward.1}
  #allocation0 [shape = 'u32[]', space=smem, size = 0x4, offset = 0x4, fixed_abs, tag = 'smem constant byte address 0x4 - core index']
  #allocation1 [shape = 'u32[144,128]{1,0:T(1,128)}', space=vmem, size = 0x12000, scoped, tag = 'internal scratch']
  %s0 = inlined_call_operand.vmem [shape: f32[256,32], index: 0, kind: input, shape index: {}]
  %s1 = inlined_call_operand.vmem [shape: bf16[3,128,128], index: 1, kind: input, shape index: {}]
  %s2 = inlined_call_operand.vmem [shape: f32[3,1,128], index: 2, kind: input, shape index: {}]
  %s3 = inlined_call_operand.vmem [shape: f32[256,128], index: 3, kind: output, shape index: {}]
  %s4 = sld [smem:[#allocation0]]
  $region45: #{neural_network_forward.1} parent=0
    _
  %s6 = ssub.s32 1, %s4
  %s7 = scalar_select 0, %s6, %s4
  loop: start=0, step=1, limit=4
  $region2: #{neural_network_forward.1} parent=0 // loop_pre_header
    _
  $region3: #{neural_network_forward.1} parent=0 // loop_header
    %s9 = sphi 0, %s13
    %p10 = scmp.ge.s32.totalorder %s9, 4
    %s19 = sphi 0, %s21
    %s22 = sphi 0, %s19
    %s23 = sphi 0, %s22
    %s39 = sphi 0, %s23
    %s43 = sphi 0, %s43
    %s45 = sphi 0, %s43
    %s46 = sphi 0, %s45
    %s60 = sphi 0, %s46
    %s64 = sphi 0, %s64
    %s66 = sphi 0, %s64
    %s67 = sphi 0, %s66
    %s81 = sphi 0, %s67
    %s87 = sphi 0, %s89
    %s90 = sphi 0, %s87
    %s91 = sphi 0, %s90
    %s107 = sphi 0, %s91
  $region4: #{neural_network_forward.1} parent=0 // loop_header_branch
    %12 = sbr.rel (%p10) target = $region8
  $region5: #{neural_network_forward.1} parent=0 // loop_body
    %s14 = ssub.s32 %s9, 1
    %s15 = ssub.s32 %s9, 2
    %s16 = sadd.s32 %s9, 1
    %s17 = ssub.s32 %s9, %s16
    %p18 = scmp.eq.s32.totalorder %s17, 0
    %s20 = sadd.s32 %s19, 1
    %s21 = scalar_select %p18, %s19, %s20
    %p24 = pneg %p18
    %p25 = scmp.eq.s32.totalorder %s9, 1
    %p26 = por %p24, %p25
    %p27 = scmp.ne.s32.totalorder %s19, %s22
    %p28 = scmp.eq.s32.totalorder %s9, 0
    %p29 = por %p27, %p28
    %p30 = scmp.ne.s32.totalorder %s19, %s22
    %p31 = scmp.eq.s32.totalorder %s14, 1
    %p32 = por %p30, %p31
    %p33 = scmp.ne.s32.totalorder %s22, %s23
    %p34 = scmp.eq.s32.totalorder %s14, 0
    %p35 = por %p33, %p34
    %p36 = scmp.ne.s32.totalorder %s22, %s23
    %p37 = scmp.eq.s32.totalorder %s15, 1
    %p38 = por %p36, %p37
    %p40 = scmp.ne.s32.totalorder %s23, %s39
    %p41 = scmp.eq.s32.totalorder %s15, 0
    %p42 = por %p40, %p41
    %s44 = sadd.s32 %s43, 1
    %p47 = scmp.eq.s32.totalorder %s9, 1
    %p48 = scmp.ne.s32.totalorder %s43, %s45
    %p49 = scmp.eq.s32.totalorder %s9, 0
    %p50 = por %p48, %p49
    %p51 = scmp.ne.s32.totalorder %s43, %s45
    %p52 = scmp.eq.s32.totalorder %s14, 1
    %p53 = por %p51, %p52
    %p54 = scmp.ne.s32.totalorder %s45, %s46
    %p55 = scmp.eq.s32.totalorder %s14, 0
    %p56 = por %p54, %p55
    %p57 = scmp.ne.s32.totalorder %s45, %s46
    %p58 = scmp.eq.s32.totalorder %s15, 1
    %p59 = por %p57, %p58
    %p61 = scmp.ne.s32.totalorder %s46, %s60
    %p62 = scmp.eq.s32.totalorder %s15, 0
    %p63 = por %p61, %p62
    %s65 = sadd.s32 %s64, 1
    %p68 = scmp.eq.s32.totalorder %s9, 1
    %p69 = scmp.ne.s32.totalorder %s64, %s66
    %p70 = scmp.eq.s32.totalorder %s9, 0
    %p71 = por %p69, %p70
    %p72 = scmp.ne.s32.totalorder %s64, %s66
    %p73 = scmp.eq.s32.totalorder %s14, 1
    %p74 = por %p72, %p73
    %p75 = scmp.ne.s32.totalorder %s66, %s67
    %p76 = scmp.eq.s32.totalorder %s14, 0
    %p77 = por %p75, %p76
    %p78 = scmp.ne.s32.totalorder %s66, %s67
    %p79 = scmp.eq.s32.totalorder %s15, 1
    %p80 = por %p78, %p79
    %p82 = scmp.ne.s32.totalorder %s67, %s81
    %p83 = scmp.eq.s32.totalorder %s15, 0
    %p84 = por %p82, %p83
    %s85 = ssub.s32 %s9, %s16
    %p86 = scmp.eq.s32.totalorder %s85, 0
    %s88 = sadd.s32 %s87, 1
    %s89 = scalar_select %p86, %s87, %s88
    %p92 = pneg %p86
    %p93 = scmp.eq.s32.totalorder %s9, 1
    %p94 = por %p92, %p93
    %p95 = scmp.ne.s32.totalorder %s87, %s90
    %p96 = scmp.eq.s32.totalorder %s9, 0
    %p97 = por %p95, %p96
    %p98 = scmp.ne.s32.totalorder %s87, %s90
    %p99 = scmp.eq.s32.totalorder %s14, 1
    %p100 = por %p98, %p99
    %p101 = scmp.ne.s32.totalorder %s90, %s91
    %p102 = scmp.eq.s32.totalorder %s14, 0
    %p103 = por %p101, %p102
    %p104 = scmp.ne.s32.totalorder %s90, %s91
    %p105 = scmp.eq.s32.totalorder %s15, 1
    %p106 = por %p104, %p105
    %p108 = scmp.ne.s32.totalorder %s91, %s107
    %p109 = scmp.eq.s32.totalorder %s15, 0
    %p110 = por %p108, %p109
    %p111 = scmp.le.s32.totalorder 1, %s9
    %p112 = scmp.lt.s32.totalorder %s9, 3
    %p113 = pnand %p111, %p112
    %p114 = pneg %p113
    // Predicated region
    $region9: #{neural_network_forward.1} parent=5 // pred_check
      _
    $region10: #{neural_network_forward.1} parent=5 // pred_check_branch
      %116 = sbr.rel (%p113) target = $region12
    $region11: #{neural_network_forward.1} parent=5 // pred_region
      %s117 = ssub.s32 %s9, 1
      // Predicated region
      $region13: #{neural_network_forward.1} parent=11 // pred_check
        %p118 = pneg %p56
      $region14: #{neural_network_forward.1} parent=11 // pred_check_branch
        %120 = sbr.rel (%p118) target = $region16
      $region15: #{neural_network_forward.1} parent=11 // pred_region
        _
      $region16: #{neural_network_forward.1} parent=11 // pred_fallthru
        _
      // Predicated region
      $region17: #{neural_network_forward.1} parent=11 // pred_check
        %p121 = pneg %p77
      $region18: #{neural_network_forward.1} parent=11 // pred_check_branch
        %123 = sbr.rel (%p121) target = $region20
      $region19: #{neural_network_forward.1} parent=11 // pred_region
        _
      $region20: #{neural_network_forward.1} parent=11 // pred_fallthru
        _
    $region12: #{neural_network_forward.1} parent=5 // pred_fallthru
      _
    %p124 = scmp.lt.s32.totalorder %s9, 2
    // Predicated region
    $region21: #{neural_network_forward.1} parent=5 // pred_check
      %p125 = pneg %p124
    $region22: #{neural_network_forward.1} parent=5 // pred_check_branch
      %127 = sbr.rel (%p125) target = $region24
    $region23: #{neural_network_forward.1} parent=5 // pred_region
      // Predicated region
      $region25: #{neural_network_forward.1} parent=23 // pred_check
        %p128 = pneg %p29
      $region26: #{neural_network_forward.1} parent=23 // pred_check_branch
        %130 = sbr.rel (%p128) target = $region28
      $region27: #{neural_network_forward.1} parent=23 // pred_region
        %s131 = smul.u32 16, %s9
        %p132 = scmp.lt.s32.totalorder %s131, 31
        %s133 = scalar_select %p132, %s131, 31
        %s134 = smul.addr %s133, 8
        %s135 = scalar_lea.vmem %s0, %s134
        %s136 = smul.u32 16, %s9
      $region28: #{neural_network_forward.1} parent=23 // pred_fallthru
        _
    $region24: #{neural_network_forward.1} parent=5 // pred_fallthru
      _
    %p137 = scmp.le.s32.totalorder 1, %s9
    %p138 = scmp.lt.s32.totalorder %s9, 3
    %p139 = pnand %p137, %p138
    %p140 = pneg %p139
    // Predicated region
    $region29: #{neural_network_forward.1} parent=5 // pred_check
      _
    $region30: #{neural_network_forward.1} parent=5 // pred_check_branch
      %142 = sbr.rel (%p139) target = $region32
    $region31: #{neural_network_forward.1} parent=5 // pred_region
      %s143 = ssub.s32 %s9, 1
      %s144 = smul.u32 16, %s14
      %p145 = scmp.lt.s32.totalorder %s144, 31
      %s146 = scalar_select %p145, %s144, 31
      %s147 = smul.addr %s146, 8
      %s148 = scalar_lea.vmem %s0, %s147
      %p149 = pneg %p35
      %p150 = pneg %p32
      %p151 = pneg %p56
      %p152 = pneg %p53
      %p153 = pneg %p77
      %p154 = pneg %p74
      %p155 = pneg %p103
      %p156 = pneg %p100
      %s157 = smul.u32 16, %s14
      %p158 = scmp.lt.s32.totalorder %s157, 31
      %s159 = scalar_select %p158, %s157, 31
      %s160 = smul.addr %s159, 8
      %s161 = scalar_lea.vmem %s3, %s160
      %s162 = smul.u32 16, %s14
      %p163 = scmp.lt.s32.totalorder %s162, 31
      %s164 = scalar_select %p163, %s162, 31
      %s165 = smul.addr %s164, 8
      %s166 = scalar_lea.vmem %s0, %s165
      %s167 = smul.u32 16, %s14
      %s168 = smul.u32 16, %s14
      %p169 = scmp.lt.s32.totalorder %s168, 31
      %s170 = scalar_select %p169, %s168, 31
      %s171 = smul.addr %s170, 8
      %s172 = scalar_lea.vmem %s3, %s171
      %s173 = smul.u32 16, %s14
      %v175 = vld [vmem:[%s166] sm:$0xff]
      %v176 = vld [vmem:[%s166 + $0x8] sm:$0xff]
      %v177 = vld [vmem:[%s166 + $0x10] sm:$0xff]
      %v178 = vld [vmem:[%s166 + $0x18] sm:$0xff]
      %v179 = vld [vmem:[%s166 + $0x20] sm:$0xff]
      %v180 = vld [vmem:[%s166 + $0x28] sm:$0xff]
      %v181 = vld [vmem:[%s166 + $0x30] sm:$0xff]
      %v182 = vld [vmem:[%s166 + $0x38] sm:$0xff]
      %v183 = vld [vmem:[%s166 + $0x40] sm:$0xff]
      %v184 = vld [vmem:[%s166 + $0x48] sm:$0xff]
      %v185 = vld [vmem:[%s166 + $0x50] sm:$0xff]
      %v186 = vld [vmem:[%s166 + $0x58] sm:$0xff]
      %v187 = vld [vmem:[%s166 + $0x60] sm:$0xff]
      %v188 = vld [vmem:[%s166 + $0x68] sm:$0xff]
      %v189 = vld [vmem:[%s166 + $0x70] sm:$0xff]
      %v190 = vld [vmem:[%s166 + $0x78] sm:$0xff]
      %v191 = vpack.c.bf16 %v176, %v175
      %v192 = vpack.c.bf16 %v178, %v177
      %v193 = vpack.c.bf16 %v180, %v179
      %v194 = vpack.c.bf16 %v182, %v181
      %v195 = vpack.c.bf16 %v184, %v183
      %v196 = vpack.c.bf16 %v186, %v185
      %v197 = vpack.c.bf16 %v188, %v187
      %v198 = vpack.c.bf16 %v190, %v189
      %v199 = vld [vmem:[%s1] sm:$0xf]
      %v200 = vld [vmem:[%s1 + $0x4] sm:$0xf]
      %v201 = vld [vmem:[%s1 + $0x8] sm:$0xf]
      %v202 = vld [vmem:[%s1 + $0xc] sm:$0xf]
      %v203 = vld [vmem:[%s2] sm:$0x1]
      %v205 = vlaneseq
      %v206 = vshrl.u32 %v205, 7
      %v207 = vsub.s32 0, %v206
      %v208 = vrot.slane %v203, %v207
      %v214 = vunpack.c.l.b16 %v199
      %v215 = vunpack.c.l.b16 %v200
      %v216 = vunpack.c.l.b16 %v201
      %v217 = vunpack.c.l.b16 %v202
      %v218 = vpack.c.b16 %v215, %v214
      %v219 = vpack.c.b16 %v217, %v216
      %vm222 = vcmask 261120
      %v224 = vsel %vm222, %v191, 0
      %v227 = vsel %vm222, %v192, 0
      %v230 = vsel %vm222, %v193, 0
      %v233 = vsel %vm222, %v194, 0
      %v236 = vsel %vm222, %v195, 0
      %v239 = vsel %vm222, %v196, 0
      %v242 = vsel %vm222, %v197, 0
      %v245 = vsel %vm222, %v198, 0
      %247 = vmatprep.subr.bf16.mxu0 0
      %248 = vmatpush1.bf16.msra.mxu0 %v218
      %249 = vmatprep.subr.bf16.mxu0 0
      %250 = vmatpush1.bf16.msra.mxu0 %v219
      %251 = vmatprep.subr.bf16.mxu0 0
      %252 = vmatpush1.bf16.msra.mxu0 0
      %253 = vmatprep.subr.bf16.mxu0 0
      %254 = vmatpush1.bf16.msra.mxu0 0
      %255 = vmatprep.subr.bf16.mxu0 0
      %256 = vmatpush1.bf16.msra.mxu0 0
      %257 = vmatprep.subr.bf16.mxu0 0
      %258 = vmatpush1.bf16.msra.mxu0 0
      %259 = vmatprep.subr.bf16.mxu0 0
      %260 = vmatpush1.bf16.msra.mxu0 0
      %261 = vmatprep.subr.bf16.mxu0 0
      %262 = vmatpush1.bf16.msra.mxu0 0
      %263 = vmatprep.subr.bf16.mxu0 0
      %264 = vmatpush1.bf16.msra.mxu0 0
      %265 = vmatprep.subr.bf16.mxu0 0
      %266 = vmatpush1.bf16.msra.mxu0 0
      %267 = vmatprep.subr.bf16.mxu0 0
      %268 = vmatpush1.bf16.msra.mxu0 0
      %269 = vmatprep.subr.bf16.mxu0 0
      %270 = vmatpush1.bf16.msra.mxu0 0
      %271 = vmatprep.subr.bf16.mxu0 0
      %272 = vmatpush1.bf16.msra.mxu0 0
      %273 = vmatprep.subr.bf16.mxu0 0
      %274 = vmatpush1.bf16.msra.mxu0 0
      %275 = vmatprep.subr.bf16.mxu0 0
      %276 = vmatpush1.bf16.msra.mxu0 0
      %277 = vmatprep.subr.bf16.mxu0 0
      %278 = vmatpush1.bf16.msra.mxu0 0
      %279 = vmatprep.mubr.bf16.mxu0 0
      %280 = vmatmul.mubr.bf16.gmra.mrb[0].mxu0 %v224
      %v281 = vpop.f32.mrb[0].mxu0
      %v282 = vadd.f32 %v208, %v281
      %v283 = vpop.f32.mrb[0].mxu0
      %v284 = vpop.f32.mrb[0].mxu0
      %v285 = vadd.f32 %v208, %v284
      %v286 = vpop.f32.mrb[0].mxu0
      %287 = vmatprep.mubr.bf16.mxu0 0
      %288 = vmatmul.mubr.bf16.gmra.mrb[0].mxu0 %v227
      %v289 = vpop.f32.mrb[0].mxu0
      %v290 = vadd.f32 %v208, %v289
      %v291 = vpop.f32.mrb[0].mxu0
      %v292 = vpop.f32.mrb[0].mxu0
      %v293 = vadd.f32 %v208, %v292
      %v294 = vpop.f32.mrb[0].mxu0
      %295 = vmatprep.mubr.bf16.mxu0 0
      %296 = vmatmul.mubr.bf16.gmra.mrb[0].mxu0 %v230
      %v297 = vpop.f32.mrb[0].mxu0
      %v298 = vadd.f32 %v208, %v297
      %v299 = vpop.f32.mrb[0].mxu0
      %v300 = vpop.f32.mrb[0].mxu0
      %v301 = vadd.f32 %v208, %v300
      %v302 = vpop.f32.mrb[0].mxu0
      %303 = vmatprep.mubr.bf16.mxu0 0
      %304 = vmatmul.mubr.bf16.gmra.mrb[0].mxu0 %v233
      %v305 = vpop.f32.mrb[0].mxu0
      %v306 = vadd.f32 %v208, %v305
      %v307 = vpop.f32.mrb[0].mxu0
      %v308 = vpop.f32.mrb[0].mxu0
      %v309 = vadd.f32 %v208, %v308
      %v310 = vpop.f32.mrb[0].mxu0
      %311 = vmatprep.mubr.bf16.mxu0 0
      %312 = vmatmul.mubr.bf16.gmra.mrb[0].mxu0 %v236
      %v313 = vpop.f32.mrb[0].mxu0
      %v314 = vadd.f32 %v208, %v313
      %v315 = vpop.f32.mrb[0].mxu0
      %v316 = vpop.f32.mrb[0].mxu0
      %v317 = vadd.f32 %v208, %v316
      %v318 = vpop.f32.mrb[0].mxu0
      %319 = vmatprep.mubr.bf16.mxu0 0
      %320 = vmatmul.mubr.bf16.gmra.mrb[0].mxu0 %v239
      %v321 = vpop.f32.mrb[0].mxu0
      %v322 = vadd.f32 %v208, %v321
      %v323 = vpop.f32.mrb[0].mxu0
      %v324 = vpop.f32.mrb[0].mxu0
      %v325 = vadd.f32 %v208, %v324
      %v326 = vpop.f32.mrb[0].mxu0
      %327 = vmatprep.mubr.bf16.mxu0 0
      %328 = vmatmul.mubr.bf16.gmra.mrb[0].mxu0 %v242
      %v329 = vpop.f32.mrb[0].mxu0
      %v330 = vadd.f32 %v208, %v329
      %v331 = vpop.f32.mrb[0].mxu0
      %v332 = vpop.f32.mrb[0].mxu0
      %v333 = vadd.f32 %v208, %v332
      %v334 = vpop.f32.mrb[0].mxu0
      %335 = vmatprep.mubr.bf16.mxu0 0
      %336 = vmatmul.mubr.bf16.gmra.mrb[0].mxu0 %v245
      %v337 = vpop.f32.mrb[0].mxu0
      %v338 = vadd.f32 %v208, %v337
      %v339 = vpop.f32.mrb[0].mxu0
      %v340 = vpop.f32.mrb[0].mxu0
      %v341 = vadd.f32 %v208, %v340
      %v342 = vpop.f32.mrb[0].mxu0
      %343 = vdwg.mxu0
      %v344 = vtanh.pop %v282
      %v345 = vtanh.pop %v285
      %v346 = vtanh.pop %v290
      %v347 = vtanh.pop %v293
      %v348 = vtanh.pop %v298
      %v349 = vtanh.pop %v301
      %v350 = vtanh.pop %v306
      %v351 = vtanh.pop %v309
      %v352 = vtanh.pop %v314
      %v353 = vtanh.pop %v317
      %v354 = vtanh.pop %v322
      %v355 = vtanh.pop %v325
      %v356 = vtanh.pop %v330
      %v357 = vtanh.pop %v333
      %v358 = vtanh.pop %v338
      %v359 = vtanh.pop %v341
      %v360 = vpack.c.bf16 %v345, %v344
      %v361 = vpack.c.bf16 %v347, %v346
      %v362 = vpack.c.bf16 %v349, %v348
      %v363 = vpack.c.bf16 %v351, %v350
      %v364 = vpack.c.bf16 %v353, %v352
      %v365 = vpack.c.bf16 %v355, %v354
      %v366 = vpack.c.bf16 %v357, %v356
      %v367 = vpack.c.bf16 %v359, %v358
      %s368 = scalar_lea.vmem %s1, 64
      %v369 = vld [vmem:[%s368] sm:$0xf]
      %v370 = vld [vmem:[%s368 + $0x4] sm:$0xf]
      %v371 = vld [vmem:[%s368 + $0x8] sm:$0xf]
      %v372 = vld [vmem:[%s368 + $0xc] sm:$0xf]
      %v373 = vld [vmem:[%s368 + $0x10] sm:$0xf]
      %v374 = vld [vmem:[%s368 + $0x14] sm:$0xf]
      %v375 = vld [vmem:[%s368 + $0x18] sm:$0xf]
      %v376 = vld [vmem:[%s368 + $0x1c] sm:$0xf]
      %v377 = vld [vmem:[%s368 + $0x20] sm:$0xf]
      %v378 = vld [vmem:[%s368 + $0x24] sm:$0xf]
      %v379 = vld [vmem:[%s368 + $0x28] sm:$0xf]
      %v380 = vld [vmem:[%s368 + $0x2c] sm:$0xf]
      %v381 = vld [vmem:[%s368 + $0x30] sm:$0xf]
      %v382 = vld [vmem:[%s368 + $0x34] sm:$0xf]
      %v383 = vld [vmem:[%s368 + $0x38] sm:$0xf]
      %v384 = vld [vmem:[%s368 + $0x3c] sm:$0xf]
      %s385 = scalar_lea.vmem %s2, 1
      %v386 = vld [vmem:[%s385] sm:$0x1]
      %v388 = vlaneseq
      %v389 = vshrl.u32 %v388, 7
      %v390 = vsub.s32 0, %v389
      %v391 = vrot.slane %v386, %v390
      %v409 = vunpack.c.l.b16 %v369
      %v410 = vunpack.c.l.b16 %v370
      %v411 = vunpack.c.l.b16 %v371
      %v412 = vunpack.c.l.b16 %v372
      %v413 = vunpack.c.l.b16 %v373
      %v414 = vunpack.c.l.b16 %v374
      %v415 = vunpack.c.l.b16 %v375
      %v416 = vunpack.c.l.b16 %v376
      %v417 = vunpack.c.l.b16 %v377
      %v418 = vunpack.c.l.b16 %v378
      %v419 = vunpack.c.l.b16 %v379
      %v420 = vunpack.c.l.b16 %v380
      %v421 = vunpack.c.l.b16 %v381
      %v422 = vunpack.c.l.b16 %v382
      %v423 = vunpack.c.l.b16 %v383
      %v424 = vunpack.c.l.b16 %v384
      %v425 = vpack.c.b16 %v410, %v409
      %v426 = vpack.c.b16 %v412, %v411
      %v427 = vpack.c.b16 %v414, %v413
      %v428 = vpack.c.b16 %v416, %v415
      %v429 = vpack.c.b16 %v418, %v417
      %v430 = vpack.c.b16 %v420, %v419
      %v431 = vpack.c.b16 %v422, %v421
      %v432 = vpack.c.b16 %v424, %v423
      %441 = vmatprep.subr.bf16.mxu0 0
      %442 = vmatpush1.bf16.msra.mxu0 %v425
      %443 = vmatprep.subr.bf16.mxu0 0
      %444 = vmatpush1.bf16.msra.mxu0 %v426
      %445 = vmatprep.subr.bf16.mxu0 0
      %446 = vmatpush1.bf16.msra.mxu0 %v427
      %447 = vmatprep.subr.bf16.mxu0 0
      %448 = vmatpush1.bf16.msra.mxu0 %v428
      %449 = vmatprep.subr.bf16.mxu0 0
      %450 = vmatpush1.bf16.msra.mxu0 %v429
      %451 = vmatprep.subr.bf16.mxu0 0
      %452 = vmatpush1.bf16.msra.mxu0 %v430
      %453 = vmatprep.subr.bf16.mxu0 0
      %454 = vmatpush1.bf16.msra.mxu0 %v431
      %455 = vmatprep.subr.bf16.mxu0 0
      %456 = vmatpush1.bf16.msra.mxu0 %v432
      %457 = vmatprep.subr.bf16.mxu0 0
      %458 = vmatpush1.bf16.msra.mxu0 0
      %459 = vmatprep.subr.bf16.mxu0 0
      %460 = vmatpush1.bf16.msra.mxu0 0
      %461 = vmatprep.subr.bf16.mxu0 0
      %462 = vmatpush1.bf16.msra.mxu0 0
      %463 = vmatprep.subr.bf16.mxu0 0
      %464 = vmatpush1.bf16.msra.mxu0 0
      %465 = vmatprep.subr.bf16.mxu0 0
      %466 = vmatpush1.bf16.msra.mxu0 0
      %467 = vmatprep.subr.bf16.mxu0 0
      %468 = vmatpush1.bf16.msra.mxu0 0
      %469 = vmatprep.subr.bf16.mxu0 0
      %470 = vmatpush1.bf16.msra.mxu0 0
      %471 = vmatprep.subr.bf16.mxu0 0
      %472 = vmatpush1.bf16.msra.mxu0 0
      %473 = vmatprep.mubr.bf16.mxu0 0
      %474 = vmatmul.mubr.bf16.gmra.mrb[0].mxu0 %v360
      %v475 = vpop.f32.mrb[0].mxu0
      %v476 = vadd.f32 %v391, %v475
      %v477 = vpop.f32.mrb[0].mxu0
      %v478 = vpop.f32.mrb[0].mxu0
      %v479 = vadd.f32 %v391, %v478
      %v480 = vpop.f32.mrb[0].mxu0
      %481 = vmatprep.mubr.bf16.mxu0 0
      %482 = vmatmul.mubr.bf16.gmra.mrb[0].mxu0 %v361
      %v483 = vpop.f32.mrb[0].mxu0
      %v484 = vadd.f32 %v391, %v483
      %v485 = vpop.f32.mrb[0].mxu0
      %v486 = vpop.f32.mrb[0].mxu0
      %v487 = vadd.f32 %v391, %v486
      %v488 = vpop.f32.mrb[0].mxu0
      %489 = vmatprep.mubr.bf16.mxu0 0
      %490 = vmatmul.mubr.bf16.gmra.mrb[0].mxu0 %v362
      %v491 = vpop.f32.mrb[0].mxu0
      %v492 = vadd.f32 %v391, %v491
      %v493 = vpop.f32.mrb[0].mxu0
      %v494 = vpop.f32.mrb[0].mxu0
      %v495 = vadd.f32 %v391, %v494
      %v496 = vpop.f32.mrb[0].mxu0
      %497 = vmatprep.mubr.bf16.mxu0 0
      %498 = vmatmul.mubr.bf16.gmra.mrb[0].mxu0 %v363
      %v499 = vpop.f32.mrb[0].mxu0
      %v500 = vadd.f32 %v391, %v499
      %v501 = vpop.f32.mrb[0].mxu0
      %v502 = vpop.f32.mrb[0].mxu0
      %v503 = vadd.f32 %v391, %v502
      %v504 = vpop.f32.mrb[0].mxu0
      %505 = vmatprep.mubr.bf16.mxu0 0
      %506 = vmatmul.mubr.bf16.gmra.mrb[0].mxu0 %v364
      %v507 = vpop.f32.mrb[0].mxu0
      %v508 = vadd.f32 %v391, %v507
      %v509 = vpop.f32.mrb[0].mxu0
      %v510 = vpop.f32.mrb[0].mxu0
      %v511 = vadd.f32 %v391, %v510
      %v512 = vpop.f32.mrb[0].mxu0
      %513 = vmatprep.mubr.bf16.mxu0 0
      %514 = vmatmul.mubr.bf16.gmra.mrb[0].mxu0 %v365
      %v515 = vpop.f32.mrb[0].mxu0
      %v516 = vadd.f32 %v391, %v515
      %v517 = vpop.f32.mrb[0].mxu0
      %v518 = vpop.f32.mrb[0].mxu0
      %v519 = vadd.f32 %v391, %v518
      %v520 = vpop.f32.mrb[0].mxu0
      %521 = vmatprep.mubr.bf16.mxu0 0
      %522 = vmatmul.mubr.bf16.gmra.mrb[0].mxu0 %v366
      %v523 = vpop.f32.mrb[0].mxu0
      %v524 = vadd.f32 %v391, %v523
      %v525 = vpop.f32.mrb[0].mxu0
      %v526 = vpop.f32.mrb[0].mxu0
      %v527 = vadd.f32 %v391, %v526
      %v528 = vpop.f32.mrb[0].mxu0
      %529 = vmatprep.mubr.bf16.mxu0 0
      %530 = vmatmul.mubr.bf16.gmra.mrb[0].mxu0 %v367
      %v531 = vpop.f32.mrb[0].mxu0
      %v532 = vadd.f32 %v391, %v531
      %v533 = vpop.f32.mrb[0].mxu0
      %v534 = vpop.f32.mrb[0].mxu0
      %v535 = vadd.f32 %v391, %v534
      %v536 = vpop.f32.mrb[0].mxu0
      %537 = vdwg.mxu0
      %v538 = vtanh.pop %v476
      %v539 = vtanh.pop %v479
      %v540 = vtanh.pop %v484
      %v541 = vtanh.pop %v487
      %v542 = vtanh.pop %v492
      %v543 = vtanh.pop %v495
      %v544 = vtanh.pop %v500
      %v545 = vtanh.pop %v503
      %v546 = vtanh.pop %v508
      %v547 = vtanh.pop %v511
      %v548 = vtanh.pop %v516
      %v549 = vtanh.pop %v519
      %v550 = vtanh.pop %v524
      %v551 = vtanh.pop %v527
      %v552 = vtanh.pop %v532
      %v553 = vtanh.pop %v535
      %v554 = vpack.c.bf16 %v539, %v538
      %v555 = vpack.c.bf16 %v541, %v540
      %v556 = vpack.c.bf16 %v543, %v542
      %v557 = vpack.c.bf16 %v545, %v544
      %v558 = vpack.c.bf16 %v547, %v546
      %v559 = vpack.c.bf16 %v549, %v548
      %v560 = vpack.c.bf16 %v551, %v550
      %v561 = vpack.c.bf16 %v553, %v552
      %s562 = scalar_lea.vmem %s1, 128
      %v563 = vld [vmem:[%s562] sm:$0xf]
      %v564 = vld [vmem:[%s562 + $0x4] sm:$0xf]
      %v565 = vld [vmem:[%s562 + $0x8] sm:$0xf]
      %v566 = vld [vmem:[%s562 + $0xc] sm:$0xf]
      %v567 = vld [vmem:[%s562 + $0x10] sm:$0xf]
      %v568 = vld [vmem:[%s562 + $0x14] sm:$0xf]
      %v569 = vld [vmem:[%s562 + $0x18] sm:$0xf]
      %v570 = vld [vmem:[%s562 + $0x1c] sm:$0xf]
      %v571 = vld [vmem:[%s562 + $0x20] sm:$0xf]
      %v572 = vld [vmem:[%s562 + $0x24] sm:$0xf]
      %v573 = vld [vmem:[%s562 + $0x28] sm:$0xf]
      %v574 = vld [vmem:[%s562 + $0x2c] sm:$0xf]
      %v575 = vld [vmem:[%s562 + $0x30] sm:$0xf]
      %v576 = vld [vmem:[%s562 + $0x34] sm:$0xf]
      %v577 = vld [vmem:[%s562 + $0x38] sm:$0xf]
      %v578 = vld [vmem:[%s562 + $0x3c] sm:$0xf]
      %s579 = scalar_lea.vmem %s2, 2
      %v580 = vld [vmem:[%s579] sm:$0x1]
      %v582 = vlaneseq
      %v583 = vshrl.u32 %v582, 7
      %v584 = vsub.s32 0, %v583
      %v585 = vrot.slane %v580, %v584
      %v603 = vunpack.c.l.b16 %v563
      %v604 = vunpack.c.l.b16 %v564
      %v605 = vunpack.c.l.b16 %v565
      %v606 = vunpack.c.l.b16 %v566
      %v607 = vunpack.c.l.b16 %v567
      %v608 = vunpack.c.l.b16 %v568
      %v609 = vunpack.c.l.b16 %v569
      %v610 = vunpack.c.l.b16 %v570
      %v611 = vunpack.c.l.b16 %v571
      %v612 = vunpack.c.l.b16 %v572
      %v613 = vunpack.c.l.b16 %v573
      %v614 = vunpack.c.l.b16 %v574
      %v615 = vunpack.c.l.b16 %v575
      %v616 = vunpack.c.l.b16 %v576
      %v617 = vunpack.c.l.b16 %v577
      %v618 = vunpack.c.l.b16 %v578
      %v619 = vpack.c.b16 %v604, %v603
      %v620 = vpack.c.b16 %v606, %v605
      %v621 = vpack.c.b16 %v608, %v607
      %v622 = vpack.c.b16 %v610, %v609
      %v623 = vpack.c.b16 %v612, %v611
      %v624 = vpack.c.b16 %v614, %v613
      %v625 = vpack.c.b16 %v616, %v615
      %v626 = vpack.c.b16 %v618, %v617
      %635 = vmatprep.subr.bf16.mxu0 0
      %636 = vmatpush1.bf16.msra.mxu0 %v619
      %637 = vmatprep.subr.bf16.mxu0 0
      %638 = vmatpush1.bf16.msra.mxu0 %v620
      %639 = vmatprep.subr.bf16.mxu0 0
      %640 = vmatpush1.bf16.msra.mxu0 %v621
      %641 = vmatprep.subr.bf16.mxu0 0
      %642 = vmatpush1.bf16.msra.mxu0 %v622
      %643 = vmatprep.subr.bf16.mxu0 0
      %644 = vmatpush1.bf16.msra.mxu0 %v623
      %645 = vmatprep.subr.bf16.mxu0 0
      %646 = vmatpush1.bf16.msra.mxu0 %v624
      %647 = vmatprep.subr.bf16.mxu0 0
      %648 = vmatpush1.bf16.msra.mxu0 %v625
      %649 = vmatprep.subr.bf16.mxu0 0
      %650 = vmatpush1.bf16.msra.mxu0 %v626
      %651 = vmatprep.subr.bf16.mxu0 0
      %652 = vmatpush1.bf16.msra.mxu0 0
      %653 = vmatprep.subr.bf16.mxu0 0
      %654 = vmatpush1.bf16.msra.mxu0 0
      %655 = vmatprep.subr.bf16.mxu0 0
      %656 = vmatpush1.bf16.msra.mxu0 0
      %657 = vmatprep.subr.bf16.mxu0 0
      %658 = vmatpush1.bf16.msra.mxu0 0
      %659 = vmatprep.subr.bf16.mxu0 0
      %660 = vmatpush1.bf16.msra.mxu0 0
      %661 = vmatprep.subr.bf16.mxu0 0
      %662 = vmatpush1.bf16.msra.mxu0 0
      %663 = vmatprep.subr.bf16.mxu0 0
      %664 = vmatpush1.bf16.msra.mxu0 0
      %665 = vmatprep.subr.bf16.mxu0 0
      %666 = vmatpush1.bf16.msra.mxu0 0
      %667 = vmatprep.mubr.bf16.mxu0 0
      %668 = vmatmul.mubr.bf16.gmra.mrb[0].mxu0 %v554
      %v669 = vpop.f32.mrb[0].mxu0
      %v670 = vadd.f32 %v585, %v669
      %v671 = vpop.f32.mrb[0].mxu0
      %v672 = vpop.f32.mrb[0].mxu0
      %v673 = vadd.f32 %v585, %v672
      %v674 = vpop.f32.mrb[0].mxu0
      %675 = vmatprep.mubr.bf16.mxu0 0
      %676 = vmatmul.mubr.bf16.gmra.mrb[0].mxu0 %v555
      %v677 = vpop.f32.mrb[0].mxu0
      %v678 = vadd.f32 %v585, %v677
      %v679 = vpop.f32.mrb[0].mxu0
      %v680 = vpop.f32.mrb[0].mxu0
      %v681 = vadd.f32 %v585, %v680
      %v682 = vpop.f32.mrb[0].mxu0
      %683 = vmatprep.mubr.bf16.mxu0 0
      %684 = vmatmul.mubr.bf16.gmra.mrb[0].mxu0 %v556
      %v685 = vpop.f32.mrb[0].mxu0
      %v686 = vadd.f32 %v585, %v685
      %v687 = vpop.f32.mrb[0].mxu0
      %v688 = vpop.f32.mrb[0].mxu0
      %v689 = vadd.f32 %v585, %v688
      %v690 = vpop.f32.mrb[0].mxu0
      %691 = vmatprep.mubr.bf16.mxu0 0
      %692 = vmatmul.mubr.bf16.gmra.mrb[0].mxu0 %v557
      %v693 = vpop.f32.mrb[0].mxu0
      %v694 = vadd.f32 %v585, %v693
      %v695 = vpop.f32.mrb[0].mxu0
      %v696 = vpop.f32.mrb[0].mxu0
      %v697 = vadd.f32 %v585, %v696
      %v698 = vpop.f32.mrb[0].mxu0
      %699 = vmatprep.mubr.bf16.mxu0 0
      %700 = vmatmul.mubr.bf16.gmra.mrb[0].mxu0 %v558
      %v701 = vpop.f32.mrb[0].mxu0
      %v702 = vadd.f32 %v585, %v701
      %v703 = vpop.f32.mrb[0].mxu0
      %v704 = vpop.f32.mrb[0].mxu0
      %v705 = vadd.f32 %v585, %v704
      %v706 = vpop.f32.mrb[0].mxu0
      %707 = vmatprep.mubr.bf16.mxu0 0
      %708 = vmatmul.mubr.bf16.gmra.mrb[0].mxu0 %v559
      %v709 = vpop.f32.mrb[0].mxu0
      %v710 = vadd.f32 %v585, %v709
      %v711 = vpop.f32.mrb[0].mxu0
      %v712 = vpop.f32.mrb[0].mxu0
      %v713 = vadd.f32 %v585, %v712
      %v714 = vpop.f32.mrb[0].mxu0
      %715 = vmatprep.mubr.bf16.mxu0 0
      %716 = vmatmul.mubr.bf16.gmra.mrb[0].mxu0 %v560
      %v717 = vpop.f32.mrb[0].mxu0
      %v718 = vadd.f32 %v585, %v717
      %v719 = vpop.f32.mrb[0].mxu0
      %v720 = vpop.f32.mrb[0].mxu0
      %v721 = vadd.f32 %v585, %v720
      %v722 = vpop.f32.mrb[0].mxu0
      %723 = vmatprep.mubr.bf16.mxu0 0
      %724 = vmatmul.mubr.bf16.gmra.mrb[0].mxu0 %v561
      %v725 = vpop.f32.mrb[0].mxu0
      %v726 = vadd.f32 %v585, %v725
      %v727 = vpop.f32.mrb[0].mxu0
      %v728 = vpop.f32.mrb[0].mxu0
      %v729 = vadd.f32 %v585, %v728
      %v730 = vpop.f32.mrb[0].mxu0
      %731 = vdwg.mxu0
      %732 = vst [vmem:[%s172] sm:$0xff] %v670
      %733 = vst [vmem:[%s172 + $0x8] sm:$0xff] %v673
      %734 = vst [vmem:[%s172 + $0x10] sm:$0xff] %v678
      %735 = vst [vmem:[%s172 + $0x18] sm:$0xff] %v681
      %736 = vst [vmem:[%s172 + $0x20] sm:$0xff] %v686
      %737 = vst [vmem:[%s172 + $0x28] sm:$0xff] %v689
      %738 = vst [vmem:[%s172 + $0x30] sm:$0xff] %v694
      %739 = vst [vmem:[%s172 + $0x38] sm:$0xff] %v697
      %740 = vst [vmem:[%s172 + $0x40] sm:$0xff] %v702
      %741 = vst [vmem:[%s172 + $0x48] sm:$0xff] %v705
      %742 = vst [vmem:[%s172 + $0x50] sm:$0xff] %v710
      %743 = vst [vmem:[%s172 + $0x58] sm:$0xff] %v713
      %744 = vst [vmem:[%s172 + $0x60] sm:$0xff] %v718
      %745 = vst [vmem:[%s172 + $0x68] sm:$0xff] %v721
      %746 = vst [vmem:[%s172 + $0x70] sm:$0xff] %v726
      %747 = vst [vmem:[%s172 + $0x78] sm:$0xff] %v729
      %s748 = smul.u32 16, %s14
      %p749 = scmp.lt.s32.totalorder %s748, 31
      %s750 = scalar_select %p749, %s748, 31
      %s751 = smul.addr %s750, 8
      %s752 = scalar_lea.vmem %s3, %s751
      // Predicated region
      $region33: #{neural_network_forward.1} parent=31 // pred_check
        %p753 = pneg %p100
      $region34: #{neural_network_forward.1} parent=31 // pred_check_branch
        %755 = sbr.rel (%p753) target = $region36
      $region35: #{neural_network_forward.1} parent=31 // pred_region
        %s756 = smul.u32 16, %s14
      $region36: #{neural_network_forward.1} parent=31 // pred_fallthru
        _
    $region32: #{neural_network_forward.1} parent=5 // pred_fallthru
      _
    %p757 = scmp.le.s32.totalorder 2, %s9
    // Predicated region
    $region37: #{neural_network_forward.1} parent=5 // pred_check
      %p758 = pneg %p757
    $region38: #{neural_network_forward.1} parent=5 // pred_check_branch
      %760 = sbr.rel (%p758) target = $region40
    $region39: #{neural_network_forward.1} parent=5 // pred_region
      %s761 = ssub.s32 %s9, 2
      // Predicated region
      $region41: #{neural_network_forward.1} parent=39 // pred_check
        %p762 = pneg %p106
      $region42: #{neural_network_forward.1} parent=39 // pred_check_branch
        %764 = sbr.rel (%p762) target = $region44
      $region43: #{neural_network_forward.1} parent=39 // pred_region
        %s765 = smul.u32 16, %s15
        %p766 = scmp.lt.s32.totalorder %s765, 31
        %s767 = scalar_select %p766, %s765, 31
        %s768 = smul.addr %s767, 8
        %s769 = scalar_lea.vmem %s3, %s768
      $region44: #{neural_network_forward.1} parent=39 // pred_fallthru
        _
    $region40: #{neural_network_forward.1} parent=5 // pred_fallthru
      _
  $region6: #{neural_network_forward.1} parent=0 // loop_footer
    %s13 = sadd.s32 1, %s9
  $region7: #{neural_network_forward.1} parent=0 // loop_footer_branch
    %8 = sbr.rel target = $region3
  $region8: #{neural_network_forward.1} parent=0 // loop_exit
    _

</llo_original>
